<compile_context>
chip_gen: v7x
topology: tpu7x:2x2x1
jax: 0.10.0
libtpu: 0.0.40
codegen_flags: <defaults>
</compile_context>

<pallas_src>
import numpy as np
import jax
import jax.numpy as jnp
from jax.experimental import pallas as pl
from jax.experimental.pallas import tpu as pltpu

ACTION_SIZE = 5            # swimmer joints
OBS_DIM = 16               # observation width, last column = raw timestep
HIDDEN = 32                # synthetic swimmer MLP hidden width
HIDDEN_PAD = 128           # lane-padded hidden width (full MXU/vreg tiles)
OUT_PAD = 128              # lane-padded matmul N dim (result sliced to 5)
BATCH = 8

JOINT_LIMIT = 2.0 * np.pi / (ACTION_SIZE + 1)
TS_TRANSFORM = (-1.0, 1.0, 0.0, 1000.0)   # (low_in, high_in, low_out, high_out)


def _round_up(x, m):
    return ((x + m - 1) // m) * m


def _default_num_tensorcores():
    # v7x has 2 TensorCores per chip; v5e/v6e have 1. Heuristic, overridable.
    try:
        kind = jax.devices()[0].device_kind.lower()
    except Exception:
        return 1
    return 2 if "v7" in kind else 1


def swimmer_actor_kernel(obs_ref, w1_ref, bias_ref, w2_ref, out_ref):
    obs = obs_ref[...].astype(jnp.float32)                     # (bm, OBS_DIM)
    pre = obs * (1.0 / JOINT_LIMIT)
    clipped = jnp.clip(pre, -1.0, 1.0)
    # Only the joint columns are clamped; the timestep (last) column must pass
    # through untouched.  Its affine transform is folded into W1 row
    # (OBS_DIM-1) and b1 by the wrapper (the fold undoes the 1/JOINT_LIMIT
    # scale), so this is exact for any timestep value.  Columns
    # ACTION_SIZE..OBS_DIM-2 have zero W1 rows, so clamping them is harmless.
    is_ts = jax.lax.broadcasted_iota(jnp.int32, (1, OBS_DIM), 1) == (OBS_DIM - 1)
    scaled = jnp.where(is_ts, pre, clipped)                    # (bm, OBS_DIM) f32

    # Layer 1: MXU matmul (bf16 or f32 operands), f32 accumulate + bias + tanh.
    h = jnp.dot(scaled.astype(w1_ref.dtype), w1_ref[...],
                preferred_element_type=jnp.float32)
    h = jnp.tanh(h + bias_ref[0:1, :])                         # (bm, HIDDEN_PAD) f32

    # Layer 2: MXU matmul, then bias + tanh on the real 5 output lanes only.
    a = jnp.dot(h.astype(w2_ref.dtype), w2_ref[...],
                preferred_element_type=jnp.float32)            # (bm, OUT_PAD) f32
    n_out = out_ref.shape[-1]
    out_ref[...] = jnp.tanh(a[:, :n_out] + bias_ref[1:2, :n_out]).astype(out_ref.dtype)


def _build_params(w1, wt, b1, w2, b2, mxu_dtype):
    """Pad + fold the swimmer-MLP parameters (one-time wrapper-side work)."""
    low_in, high_in, low_out, high_out = TS_TRANSFORM
    ts_scale = (high_out - low_out) / (high_in - low_in)       # 500
    ts_shift = low_out - low_in * ts_scale                     # 500

    # W1: (OBS_DIM, HIDDEN_PAD). Rows [ACTION_SIZE, OBS_DIM-2] are zero; row
    # OBS_DIM-1 carries the folded timestep weight (undoing the kernel's
    # 1/JOINT_LIMIT scale).
    w1_full = jnp.zeros((OBS_DIM, HIDDEN_PAD), jnp.float32)
    w1_full = w1_full.at[:ACTION_SIZE, :HIDDEN].set(w1)
    w1_full = w1_full.at[OBS_DIM - 1, :HIDDEN].set(wt[0] * ts_scale * JOINT_LIMIT)

    # Biases packed as one (2, HIDDEN_PAD) f32 block (added to f32 accumulators,
    # so they stay f32 even on the bf16 path).
    bias = jnp.zeros((2, HIDDEN_PAD), jnp.float32)
    bias = bias.at[0, :HIDDEN].set(b1[0] + wt[0] * ts_shift)
    bias = bias.at[1, :ACTION_SIZE].set(b2[0])

    # W2: (HIDDEN_PAD, OUT_PAD), padded rows/cols zero.
    w2_full = jnp.zeros((HIDDEN_PAD, OUT_PAD), jnp.float32)
    w2_full = w2_full.at[:HIDDEN, :ACTION_SIZE].set(w2)

    return w1_full.astype(mxu_dtype), bias, w2_full.astype(mxu_dtype)


def swimmer_actor(obs, w1, wt, b1, w2, b2, *, bm_max=1024, use_bf16=False,
                  num_tensorcores=None):
    """SwimmerActor forward. obs: (B, OBS_DIM) -> (B, ACTION_SIZE)."""
    B, D = obs.shape
    assert D == OBS_DIM

    if num_tensorcores is None:
        num_tensorcores = _default_num_tensorcores()

    mxu_dtype = jnp.bfloat16 if use_bf16 else jnp.float32
    w1_full, bias, w2_full = _build_params(w1, wt, b1, w2, b2, mxu_dtype)

    # --- batch-block selection (grid iterates over batch only) -------------
    bm_max = max(8, _round_up(bm_max, 8))
    b_pad = _round_up(B, 8)
    bm = min(bm_max, b_pad)
    if num_tensorcores >= 2 and b_pad >= 16:
        # Ensure >= num_tensorcores parallel grid steps so every core on a
        # 2-core chip (v7x) gets work. No effect on 1-core v5e/v6e.
        bm = min(bm, _round_up(pl.cdiv(b_pad, num_tensorcores), 8))
    b_pad = _round_up(b_pad, bm)
    grid = (b_pad // bm,)

    obs_in = obs if b_pad == B else jnp.pad(obs, ((0, b_pad - B), (0, 0)))

    out = pl.pallas_call(
        swimmer_actor_kernel,
        out_shape=jax.ShapeDtypeStruct((b_pad, ACTION_SIZE), jnp.float32),
        grid_spec=pltpu.PrefetchScalarGridSpec(
            num_scalar_prefetch=0,
            grid=grid,
            in_specs=[
                pl.BlockSpec((bm, OBS_DIM), lambda i: (i, 0)),
                # Grid-invariant operands: single-buffered (no wasted 2x VMEM).
                pl.BlockSpec((OBS_DIM, HIDDEN_PAD), lambda i: (0, 0),
                             pipeline_mode=pl.Buffered(1)),
                pl.BlockSpec((2, HIDDEN_PAD), lambda i: (0, 0),
                             pipeline_mode=pl.Buffered(1)),
                pl.BlockSpec((HIDDEN_PAD, OUT_PAD), lambda i: (0, 0),
                             pipeline_mode=pl.Buffered(1)),
            ],
            out_specs=pl.BlockSpec((bm, ACTION_SIZE), lambda i: (i, 0)),
        ),
        # Default scoped-VMEM limits are ample at bm <= 2048; set
        # pltpu.CompilerParams(vmem_limit_bytes=...) if pushing bm past ~8K.
        compiler_params=pltpu.CompilerParams(dimension_semantics=("parallel",)),
    )(obs_in, w1_full, bias, w2_full)

    return out if b_pad == B else out[:B]


def reference(obs, w1, wt, b1, w2, b2):
    low_in, high_in, low_out, high_out = TS_TRANSFORM
    jp = jnp.clip(obs[:, :ACTION_SIZE] / JOINT_LIMIT, -1.0, 1.0)
    t = obs[:, -1:]
    t = (t - low_in) / (high_in - low_in) * (high_out - low_out) + low_out
    h = jnp.tanh(jp @ w1 + t * wt + b1)
    return jnp.tanh(h @ w2 + b2)


if __name__ == "__main__":
    key = jax.random.PRNGKey(0)
    k_obs, k_w1, k_wt, k_b1, k_w2, k_b2, k_t = jax.random.split(key, 7)

    # Observations: joint angles-ish in front, raw timestep in [-1, 1] last.
    obs = jax.random.uniform(k_obs, (BATCH, OBS_DIM), jnp.float32,
                             minval=-np.pi, maxval=np.pi)
    ts = jax.random.uniform(k_t, (BATCH, 1), jnp.float32, minval=-1.0, maxval=1.0)
    obs = obs.at[:, -1:].set(ts)

    # Deterministic synthetic swimmer-MLP parameters (unpadded, "PyTorch-like").
    w1 = jax.random.normal(k_w1, (ACTION_SIZE, HIDDEN), jnp.float32) * 0.2
    wt = jax.random.normal(k_wt, (1, HIDDEN), jnp.float32) * 0.001
    b1 = jax.random.normal(k_b1, (1, HIDDEN), jnp.float32) * 0.1
    w2 = jax.random.normal(k_w2, (HIDDEN, ACTION_SIZE), jnp.float32) * 0.2
    b2 = jax.random.normal(k_b2, (1, ACTION_SIZE), jnp.float32) * 0.1

    ref = reference(obs, w1, wt, b1, w2, b2)

    # f32 MXU path.
    out = jax.block_until_ready(swimmer_actor(obs, w1, wt, b1, w2, b2))
    np.testing.assert_allclose(np.asarray(out), np.asarray(ref),
                               rtol=1e-5, atol=1e-5)

    # bf16 MXU path (v6e/v7x-friendly): bf16 operands, f32 accumulate/activations.
    out_bf16 = jax.block_until_ready(
        swimmer_actor(obs, w1, wt, b1, w2, b2, use_bf16=True))
    np.testing.assert_allclose(np.asarray(out_bf16), np.asarray(ref),
                               rtol=5e-2, atol=5e-2)

    # Ragged batch (B=13) with a forced 2-step grid: exercises the cdiv/pad
    # path and the v7x two-core block split on any generation.
    obs13 = jnp.concatenate([obs, obs[:5] * 0.5], axis=0)
    ref13 = reference(obs13, w1, wt, b1, w2, b2)
    out13 = jax.block_until_ready(
        swimmer_actor(obs13, w1, wt, b1, w2, b2, num_tensorcores=2))
    np.testing.assert_allclose(np.asarray(out13), np.asarray(ref13),
                               rtol=1e-5, atol=1e-5)

    print("KERNEL_OK")
</pallas_src>

<mosaic_0001>
module attributes {stable_mosaic.version = 11 : i64} {
  func.func @swimmer_actor_kernel(%arg0: i32, %arg1: memref<8x16xf32, #tpu.memory_space<vmem>>, %arg2: memref<16x128xf32, #tpu.memory_space<vmem>>, %arg3: memref<2x128xf32, #tpu.memory_space<vmem>>, %arg4: memref<128x128xf32, #tpu.memory_space<vmem>>, %arg5: memref<8x5xf32, #tpu.memory_space<vmem>>) attributes {dimension_semantics = [#tpu.dimension_semantics<parallel>], iteration_bounds = array<i64: 1>, scalar_prefetch = 0 : i64, scratch_operands = 0 : i64, tpu.core_type = #tpu.core_type<tc>, window_params = [{transform_indices = @transform_0, window_bounds = array<i64: 8, 16>}, {pipeline_mode = #tpu.pipeline_mode<synchronous>, transform_indices = @transform_1, window_bounds = array<i64: 16, 128>}, {pipeline_mode = #tpu.pipeline_mode<synchronous>, transform_indices = @transform_2, window_bounds = array<i64: 2, 128>}, {pipeline_mode = #tpu.pipeline_mode<synchronous>, transform_indices = @transform_3, window_bounds = array<i64: 128, 128>}, {transform_indices = @transform_4, window_bounds = array<i64: 8, 5>}]} {
    %c0 = arith.constant 0 : index
    %c0_0 = arith.constant 0 : index
    %0 = vector.load %arg1[%c0, %c0_0] : memref<8x16xf32, #tpu.memory_space<vmem>>, vector<8x16xf32>
    %cst = arith.constant 0.954929649 : f32
    %1 = vector.broadcast %cst : f32 to vector<8x16xf32>
    %2 = arith.mulf %0, %1 : vector<8x16xf32>
    %cst_1 = arith.constant -1.000000e+00 : f32
    %cst_2 = arith.constant 1.000000e+00 : f32
    %3 = vector.broadcast %cst_1 : f32 to vector<8x16xf32>
    %4 = arith.maximumf %3, %2 : vector<8x16xf32>
    %5 = vector.broadcast %cst_2 : f32 to vector<8x16xf32>
    %6 = arith.minimumf %5, %4 : vector<8x16xf32>
    %7 = tpu.iota {dimensions = array<i32: 1>} : vector<1x16xi32>
    %c15_i32 = arith.constant 15 : i32
    %8 = vector.broadcast %c15_i32 : i32 to vector<1x16xi32>
    %9 = arith.cmpi eq, %7, %8 : vector<1x16xi32>
    %10 = vector.shape_cast %9 : vector<1x16xi1> to vector<1x16xi1>
    %11 = vector.broadcast %10 : vector<1x16xi1> to vector<8x16xi1>
    %12 = arith.select %11, %2, %6 : vector<8x16xi1>, vector<8x16xf32>
    %c0_3 = arith.constant 0 : index
    %c0_4 = arith.constant 0 : index
    %13 = vector.load %arg2[%c0_3, %c0_4] : memref<16x128xf32, #tpu.memory_space<vmem>>, vector<16x128xf32>
    %cst_5 = arith.constant dense<0.000000e+00> : vector<8x128xf32>
    %14 = tpu.matmul %12, %13, %cst_5 {dimension_numbers = #tpu.dot_dimension_numbers<[1], [0], [0], [1], [0, 0, 1, 1], [], []>} : vector<8x16xf32>, vector<16x128xf32>, vector<8x128xf32> -> vector<8x128xf32>
    %c0_6 = arith.constant 0 : index
    %c0_7 = arith.constant 0 : index
    %15 = vector.load %arg3[%c0_6, %c0_7] : memref<2x128xf32, #tpu.memory_space<vmem>>, vector<1x128xf32>
    %16 = vector.broadcast %15 : vector<1x128xf32> to vector<8x128xf32>
    %17 = arith.addf %14, %16 : vector<8x128xf32>
    %18 = math.tanh %17 : vector<8x128xf32>
    %c0_8 = arith.constant 0 : index
    %c0_9 = arith.constant 0 : index
    %19 = vector.load %arg4[%c0_8, %c0_9] : memref<128x128xf32, #tpu.memory_space<vmem>>, vector<128x128xf32>
    %cst_10 = arith.constant dense<0.000000e+00> : vector<8x128xf32>
    %20 = tpu.matmul %18, %19, %cst_10 {dimension_numbers = #tpu.dot_dimension_numbers<[1], [0], [0], [1], [0, 0, 1, 1], [], []>} : vector<8x128xf32>, vector<128x128xf32>, vector<8x128xf32> -> vector<8x128xf32>
    %21 = vector.extract_strided_slice %20 {offsets = [0, 0], sizes = [8, 5], strides = [1, 1]} : vector<8x128xf32> to vector<8x5xf32>
    %c1 = arith.constant 1 : index
    %c0_11 = arith.constant 0 : index
    %22 = vector.load %arg3[%c1, %c0_11] : memref<2x128xf32, #tpu.memory_space<vmem>>, vector<1x5xf32>
    %23 = vector.broadcast %22 : vector<1x5xf32> to vector<8x5xf32>
    %24 = arith.addf %21, %23 : vector<8x5xf32>
    %25 = math.tanh %24 : vector<8x5xf32>
    %c0_12 = arith.constant 0 : index
    %c0_13 = arith.constant 0 : index
    %26 = vector.load %arg5[%c0_12, %c0_13] : memref<8x5xf32, #tpu.memory_space<vmem>>, vector<8x5xf32>
    tpu.vector_store %arg5[%c0_12, %c0_13], %25 {strides = array<i32>} : memref<8x5xf32, #tpu.memory_space<vmem>>, vector<8x5xf32>,
    return
  }
  func.func @transform_0(%arg0: i32) -> (i32, i32) {
    %c0_i32 = arith.constant 0 : i32
    %c0_i32_0 = arith.constant 0 : i32
    return %arg0, %c0_i32 : i32, i32
  }
  func.func @transform_1(%arg0: i32) -> (i32, i32) {
    %c0_i32 = arith.constant 0 : i32
    %c0_i32_0 = arith.constant 0 : i32
    %c0_i32_1 = arith.constant 0 : i32
    return %c0_i32, %c0_i32_0 : i32, i32
  }
  func.func @transform_2(%arg0: i32) -> (i32, i32) {
    %c0_i32 = arith.constant 0 : i32
    %c0_i32_0 = arith.constant 0 : i32
    %c0_i32_1 = arith.constant 0 : i32
    return %c0_i32, %c0_i32_0 : i32, i32
  }
  func.func @transform_3(%arg0: i32) -> (i32, i32) {
    %c0_i32 = arith.constant 0 : i32
    %c0_i32_0 = arith.constant 0 : i32
    %c0_i32_1 = arith.constant 0 : i32
    return %c0_i32, %c0_i32_0 : i32, i32
  }
  func.func @transform_4(%arg0: i32) -> (i32, i32) {
    %c0_i32 = arith.constant 0 : i32
    %c0_i32_0 = arith.constant 0 : i32
    return %arg0, %c0_i32 : i32, i32
  }
}

</mosaic_0001>

<llo_original>
// kernel: tpu_custom_call.1
$region0: #{tpu_custom_call.1}
  #allocation0 [shape = 'u32[]', space=smem, size = 0x4, offset = 0x4, fixed_abs, tag = 'smem constant byte address 0x4 - core index']
  #allocation1 [shape = 'u32[144,128]{1,0:T(1,128)}', space=vmem, size = 0x12000, scoped, tag = 'internal scratch']
  %s0 = inlined_call_operand.hbm [shape: f32[8,16], index: 0, kind: input, shape index: {}]
  %s1 = inlined_call_operand.hbm [shape: f32[16,128], index: 1, kind: input, shape index: {}]
  %s2 = inlined_call_operand.vmem [shape: f32[2,128], index: 2, kind: input, shape index: {}]
  %s3 = inlined_call_operand.hbm [shape: f32[128,128], index: 3, kind: input, shape index: {}]
  %s4 = inlined_call_operand.hbm [shape: f32[8,5], index: 4, kind: output, shape index: {}]
  %s5 = sld [smem:[#allocation0]]
  $region38: #{tpu_custom_call.1} parent=0
    _
  %s7 = ssub.s32 1, %s5
  %s8 = scalar_select 0, %s7, %s5
  $region1: #{tpu_custom_call.1} parent=0
    #allocation2 [shape = 'u8[4096]{0}', space=vmem, size = 0x1000, scoped, tag = 'input window, operand 0, single buffered']
    #allocation3 [shape = 's32[1]{0}', space=sflag, size = 0x4, scoped, tag = 'scoped memory for tpu_custom_call.1']
    #allocation4 [shape = 's32[1]{0}', space=sflag, size = 0x4, scoped, tag = 'scoped memory for tpu_custom_call.1']
    #allocation5 [shape = 'u8[8192]{0}', space=vmem, size = 0x2000, scoped, tag = 'input window, operand 1, single buffered']
    #allocation6 [shape = 's32[1]{0}', space=sflag, size = 0x4, scoped, tag = 'scoped memory for tpu_custom_call.1']
    #allocation7 [shape = 'u8[65536]{0}', space=vmem, size = 0x10000, scoped, tag = 'input window, operand 3, single buffered']
    #allocation8 [shape = 'u8[4096]{0}', space=vmem, size = 0x1000, scoped, tag = 'output window, operand 0, single buffered']
    %9 = vsyncpa [#allocation3], 0
    %10 = vsyncpa [#allocation6], 0
    %11 = vsyncpa [#allocation4], 0
    // Predicated region
    $region2: #{tpu_custom_call.1} parent=1 // pred_check
      _
    $region3: #{tpu_custom_call.1} parent=1 // pred_check_branch
      %13 = sbr.rel (0) target = $region5
    $region4: #{tpu_custom_call.1} parent=1 // pred_region
      %s15 = ssub.s32 128, 128
      %16 = vsyncadd [#allocation3], %s15
      %s18 = sshll.u32 [#allocation2], 4
      %s19 = int_to_ptr.vmem [resolvable:$true] %s18
      %21 = dma.hbm_to_vmem [thread:$0]  %s0, 128, %s19, [#allocation3]
    $region5: #{tpu_custom_call.1} parent=1 // pred_fallthru
      _
    // Predicated region
    $region6: #{tpu_custom_call.1} parent=1 // pred_check
      _
    $region7: #{tpu_custom_call.1} parent=1 // pred_check_branch
      %23 = sbr.rel (0) target = $region9
    $region8: #{tpu_custom_call.1} parent=1 // pred_region
      %s25 = ssub.s32 256, 256
      %26 = vsyncadd [#allocation6], %s25
      %s27 = sshll.u32 [#allocation5], 4
      %s28 = int_to_ptr.vmem [resolvable:$true] %s27
      %33 = dma.hbm_to_vmem [thread:$0]  %s1, 256, %s28, [#allocation6], 128, 128, 8
    $region9: #{tpu_custom_call.1} parent=1 // pred_fallthru
      _
    // Predicated region
    $region10: #{tpu_custom_call.1} parent=1 // pred_check
      _
    $region11: #{tpu_custom_call.1} parent=1 // pred_check_branch
      %35 = sbr.rel (0) target = $region13
    $region12: #{tpu_custom_call.1} parent=1 // pred_region
      _
    $region13: #{tpu_custom_call.1} parent=1 // pred_fallthru
      _
    // Predicated region
    $region14: #{tpu_custom_call.1} parent=1 // pred_check
      _
    $region15: #{tpu_custom_call.1} parent=1 // pred_check_branch
      %37 = sbr.rel (0) target = $region17
    $region16: #{tpu_custom_call.1} parent=1 // pred_region
      %s39 = ssub.s32 2048, 2048
      %40 = vsyncadd [#allocation6], %s39
      %s41 = sshll.u32 [#allocation7], 4
      %s42 = int_to_ptr.vmem [resolvable:$true] %s41
      %47 = dma.hbm_to_vmem [thread:$0]  %s3, 2048, %s42, [#allocation6], 128, 128, 8
    $region17: #{tpu_custom_call.1} parent=1 // pred_fallthru
      _
    // Predicated region
    $region18: #{tpu_custom_call.1} parent=1 // pred_check
      _
    $region19: #{tpu_custom_call.1} parent=1 // pred_check_branch
      %49 = sbr.rel (0) target = $region21
    $region20: #{tpu_custom_call.1} parent=1 // pred_region
      %50 = dma.done [#allocation3], 128
    $region21: #{tpu_custom_call.1} parent=1 // pred_fallthru
      _
    // Predicated region
    $region22: #{tpu_custom_call.1} parent=1 // pred_check
      _
    $region23: #{tpu_custom_call.1} parent=1 // pred_check_branch
      %52 = sbr.rel (0) target = $region25
    $region24: #{tpu_custom_call.1} parent=1 // pred_region
      %53 = dma.done [#allocation6], 256
    $region25: #{tpu_custom_call.1} parent=1 // pred_fallthru
      _
    // Predicated region
    $region26: #{tpu_custom_call.1} parent=1 // pred_check
      _
    $region27: #{tpu_custom_call.1} parent=1 // pred_check_branch
      %55 = sbr.rel (0) target = $region29
    $region28: #{tpu_custom_call.1} parent=1 // pred_region
      %56 = dma.done [#allocation6], 2048
    $region29: #{tpu_custom_call.1} parent=1 // pred_fallthru
      _
    %v57 = vld [vmem:[#allocation2] sm:$0xff]
    %v58 = vmul.f32 %v57, 0.95492965
    %v59 = vmax.f32 %v58, -1.0
    %v60 = vmin.f32 %v59, 1.0
    %v61 = vlaneseq
    %v62 = vand.u32 %v61, 127
    %vm63 = vcmp.eq.s32.totalorder %v62, 15
    %v64 = vsel %vm63, 1, 0
    %vm65 = vcmp.eq.s32.totalorder %v64, 1
    %v66 = vsel %vm65, %v58, %v60
    %v67 = vld [vmem:[#allocation5] sm:$0xff]
    %v68 = vld [vmem:[#allocation5 + $0x8] sm:$0xff]
    %v69 = vld [vmem:[%s2] sm:$0x1]
    %v70 = vlaneseq
    %v71 = vshrl.u32 %v70, 7
    %v72 = vsub.s32 0, %v71
    %v73 = vrot.slane %v69, %v72
    %vm74 = vcmask 130048
    %v76 = vsel %vm74, %v66, 0
    %78 = vmatprep.subr.mxu0 0.0
    %79 = vmatpush1.msra.mxu0 %v67
    %80 = vmatprep.subr.mxu0 0.0
    %81 = vmatpush1.msra.mxu0 %v68
    %82 = vmatprep.subr.mxu0 0.0
    %83 = vmatpush1.msra.mxu0 0.0
    %84 = vmatprep.subr.mxu0 0.0
    %85 = vmatpush1.msra.mxu0 0.0
    %86 = vmatprep.subr.mxu0 0.0
    %87 = vmatpush1.msra.mxu0 0.0
    %88 = vmatprep.subr.mxu0 0.0
    %89 = vmatpush1.msra.mxu0 0.0
    %90 = vmatprep.subr.mxu0 0.0
    %91 = vmatpush1.msra.mxu0 0.0
    %92 = vmatprep.subr.mxu0 0.0
    %93 = vmatpush1.msra.mxu0 0.0
    %94 = vmatprep.subr.mxu0 0.0
    %95 = vmatpush1.msra.mxu0 0.0
    %96 = vmatprep.subr.mxu0 0.0
    %97 = vmatpush1.msra.mxu0 0.0
    %98 = vmatprep.subr.mxu0 0.0
    %99 = vmatpush1.msra.mxu0 0.0
    %100 = vmatprep.subr.mxu0 0.0
    %101 = vmatpush1.msra.mxu0 0.0
    %102 = vmatprep.subr.mxu0 0.0
    %103 = vmatpush1.msra.mxu0 0.0
    %104 = vmatprep.subr.mxu0 0.0
    %105 = vmatpush1.msra.mxu0 0.0
    %106 = vmatprep.subr.mxu0 0.0
    %107 = vmatpush1.msra.mxu0 0.0
    %108 = vmatprep.subr.mxu0 0.0
    %109 = vmatpush1.msra.mxu0 0.0
    %110 = vmatprep.subr.mxu0 0.0
    %111 = vmatpush1.msra.mxu0 0.0
    %112 = vmatprep.subr.mxu0 0.0
    %113 = vmatpush1.msra.mxu0 0.0
    %114 = vmatprep.subr.mxu0 0.0
    %115 = vmatpush1.msra.mxu0 0.0
    %116 = vmatprep.subr.mxu0 0.0
    %117 = vmatpush1.msra.mxu0 0.0
    %118 = vmatprep.subr.mxu0 0.0
    %119 = vmatpush1.msra.mxu0 0.0
    %120 = vmatprep.subr.mxu0 0.0
    %121 = vmatpush1.msra.mxu0 0.0
    %122 = vmatprep.subr.mxu0 0.0
    %123 = vmatpush1.msra.mxu0 0.0
    %124 = vmatprep.subr.mxu0 0.0
    %125 = vmatpush1.msra.mxu0 0.0
    %126 = vmatprep.subr.mxu0 0.0
    %127 = vmatpush1.msra.mxu0 0.0
    %128 = vmatprep.subr.mxu0 0.0
    %129 = vmatpush1.msra.mxu0 0.0
    %130 = vmatprep.subr.mxu0 0.0
    %131 = vmatpush1.msra.mxu0 0.0
    %132 = vmatprep.subr.mxu0 0.0
    %133 = vmatpush1.msra.mxu0 0.0
    %134 = vmatprep.subr.mxu0 0.0
    %135 = vmatpush1.msra.mxu0 0.0
    %136 = vmatprep.subr.mxu0 0.0
    %137 = vmatpush1.msra.mxu0 0.0
    %138 = vmatprep.subr.mxu0 0.0
    %139 = vmatpush1.msra.mxu0 0.0
    %140 = vmatprep.subr.mxu0 0.0
    %141 = vmatpush1.msra.mxu0 0.0
    %142 = vmatprep.mubr.f32.mxu0 0.0
    %143 = vmatmul.mubr.f32.gmra.mrb[0].mxu0 %v76
    %v144 = vpop.f32.mrb[0].mxu0
    %v145 = vadd.f32 %v73, %v144
    %v146 = vpop.f32.mrb[0].mxu0
    %147 = vdwg.mxu0
    %v148 = vtanh.pop %v145
    %v149 = vld [vmem:[#allocation7] sm:$0xff]
    %v150 = vld [vmem:[#allocation7 + $0x8] sm:$0xff]
    %v151 = vld [vmem:[#allocation7 + $0x10] sm:$0xff]
    %v152 = vld [vmem:[#allocation7 + $0x18] sm:$0xff]
    %v153 = vld [vmem:[#allocation7 + $0x20] sm:$0xff]
    %v154 = vld [vmem:[#allocation7 + $0x28] sm:$0xff]
    %v155 = vld [vmem:[#allocation7 + $0x30] sm:$0xff]
    %v156 = vld [vmem:[#allocation7 + $0x38] sm:$0xff]
    %v157 = vld [vmem:[#allocation7 + $0x40] sm:$0xff]
    %v158 = vld [vmem:[#allocation7 + $0x48] sm:$0xff]
    %v159 = vld [vmem:[#allocation7 + $0x50] sm:$0xff]
    %v160 = vld [vmem:[#allocation7 + $0x58] sm:$0xff]
    %v161 = vld [vmem:[#allocation7 + $0x60] sm:$0xff]
    %v162 = vld [vmem:[#allocation7 + $0x68] sm:$0xff]
    %v163 = vld [vmem:[#allocation7 + $0x70] sm:$0xff]
    %v164 = vld [vmem:[#allocation7 + $0x78] sm:$0xff]
    %165 = vmatprep.subr.mxu0 0.0
    %166 = vmatpush1.msra.mxu0 %v149
    %167 = vmatprep.subr.mxu0 0.0
    %168 = vmatpush1.msra.mxu0 %v150
    %169 = vmatprep.subr.mxu0 0.0
    %170 = vmatpush1.msra.mxu0 %v151
    %171 = vmatprep.subr.mxu0 0.0
    %172 = vmatpush1.msra.mxu0 %v152
    %173 = vmatprep.subr.mxu0 0.0
    %174 = vmatpush1.msra.mxu0 %v153
    %175 = vmatprep.subr.mxu0 0.0
    %176 = vmatpush1.msra.mxu0 %v154
    %177 = vmatprep.subr.mxu0 0.0
    %178 = vmatpush1.msra.mxu0 %v155
    %179 = vmatprep.subr.mxu0 0.0
    %180 = vmatpush1.msra.mxu0 %v156
    %181 = vmatprep.subr.mxu0 0.0
    %182 = vmatpush1.msra.mxu0 %v157
    %183 = vmatprep.subr.mxu0 0.0
    %184 = vmatpush1.msra.mxu0 %v158
    %185 = vmatprep.subr.mxu0 0.0
    %186 = vmatpush1.msra.mxu0 %v159
    %187 = vmatprep.subr.mxu0 0.0
    %188 = vmatpush1.msra.mxu0 %v160
    %189 = vmatprep.subr.mxu0 0.0
    %190 = vmatpush1.msra.mxu0 %v161
    %191 = vmatprep.subr.mxu0 0.0
    %192 = vmatpush1.msra.mxu0 %v162
    %193 = vmatprep.subr.mxu0 0.0
    %194 = vmatpush1.msra.mxu0 %v163
    %195 = vmatprep.subr.mxu0 0.0
    %196 = vmatpush1.msra.mxu0 %v164
    %197 = vmatprep.subr.mxu0 0.0
    %198 = vmatpush1.msra.mxu0 0.0
    %199 = vmatprep.subr.mxu0 0.0
    %200 = vmatpush1.msra.mxu0 0.0
    %201 = vmatprep.subr.mxu0 0.0
    %202 = vmatpush1.msra.mxu0 0.0
    %203 = vmatprep.subr.mxu0 0.0
    %204 = vmatpush1.msra.mxu0 0.0
    %205 = vmatprep.subr.mxu0 0.0
    %206 = vmatpush1.msra.mxu0 0.0
    %207 = vmatprep.subr.mxu0 0.0
    %208 = vmatpush1.msra.mxu0 0.0
    %209 = vmatprep.subr.mxu0 0.0
    %210 = vmatpush1.msra.mxu0 0.0
    %211 = vmatprep.subr.mxu0 0.0
    %212 = vmatpush1.msra.mxu0 0.0
    %213 = vmatprep.subr.mxu0 0.0
    %214 = vmatpush1.msra.mxu0 0.0
    %215 = vmatprep.subr.mxu0 0.0
    %216 = vmatpush1.msra.mxu0 0.0
    %217 = vmatprep.subr.mxu0 0.0
    %218 = vmatpush1.msra.mxu0 0.0
    %219 = vmatprep.subr.mxu0 0.0
    %220 = vmatpush1.msra.mxu0 0.0
    %221 = vmatprep.subr.mxu0 0.0
    %222 = vmatpush1.msra.mxu0 0.0
    %223 = vmatprep.subr.mxu0 0.0
    %224 = vmatpush1.msra.mxu0 0.0
    %225 = vmatprep.subr.mxu0 0.0
    %226 = vmatpush1.msra.mxu0 0.0
    %227 = vmatprep.subr.mxu0 0.0
    %228 = vmatpush1.msra.mxu0 0.0
    %229 = vmatprep.mubr.f32.mxu0 0.0
    %230 = vmatmul.mubr.f32.gmra.mrb[0].mxu0 %v148
    %v231 = vpop.f32.mrb[0].mxu0
    %v232 = vadd.f32 0.0, %v231
    %v233 = vpop.f32.mrb[0].mxu0
    %234 = vdwg.mxu0
    %v235 = vld [vmem:[%s2 + $0x1] sm:$0x1]
    %v236 = vlaneseq
    %v237 = vshrl.u32 %v236, 7
    %v238 = vsub.s32 0, %v237
    %v239 = vrot.slane %v235, %v238
    %v240 = vadd.f32 %v232, %v239
    %v241 = vtanh.pop %v240
    %vm242 = vcmask 39936
    %243 = vst.msk [vmem:[#allocation8] sm:$0xff] %vm242, %v241
    // Predicated region
    $region30: #{tpu_custom_call.1} parent=1 // pred_check
      _
    $region31: #{tpu_custom_call.1} parent=1 // pred_check_branch
      %245 = sbr.rel (0) target = $region33
    $region32: #{tpu_custom_call.1} parent=1 // pred_region
      %s247 = ssub.s32 128, 128
      %248 = vsyncadd [#allocation4], %s247
      %s250 = sshll.u32 [#allocation8], 4
      %s251 = int_to_ptr.vmem [resolvable:$true] %s250
      %253 = dma.vmem_to_hbm [thread:$0]  %s251, 128, %s4, [#allocation4]
    $region33: #{tpu_custom_call.1} parent=1 // pred_fallthru
      _
    // Predicated region
    $region34: #{tpu_custom_call.1} parent=1 // pred_check
      _
    $region35: #{tpu_custom_call.1} parent=1 // pred_check_branch
      %255 = sbr.rel (0) target = $region37
    $region36: #{tpu_custom_call.1} parent=1 // pred_region
      %256 = dma.done [#allocation4], 128
    $region37: #{tpu_custom_call.1} parent=1 // pred_fallthru
      _
    %257 = vsyncpa [#allocation3], 1
    %258 = vsyncpa [#allocation6], 1
    %259 = vsyncpa [#allocation4], 1

</llo_original>
